<compile_context>
chip_gen: v7x
topology: tpu7x:2x2x1
jax: 0.10.0
libtpu: 0.0.40
codegen_flags: <defaults>
</compile_context>

<pallas_src>
import functools
import math

import jax
import jax.numpy as jnp
from jax.experimental import pallas as pl
from jax.experimental.pallas import tpu as pltpu


def _round_up(x: int, m: int) -> int:
    return ((x + m - 1) // m) * m


# ------------------------------- kernel -------------------------------------
def _attention_kernel(q_ref, k_ref, v_ref, vl_ref, out_ref, attn_ref, *,
                      lk_valid: int, compute_dtype):
    """One grid step = one batch element x one tile of query rows.

    q_ref   : (tq, D)        input dtype
    k_ref   : (Lk_pad, D)    input dtype
    v_ref   : (Lk_pad, Dv)   input dtype
    vl_ref  : (tq, 1)        int32, valid kv length per query row
    out_ref : (tq, Dv)
    attn_ref: (tq, Lk_pad)   lane-dense (Lk_pad is a multiple of 128)
    """
    tq, d = q_ref.shape
    lk_pad = k_ref.shape[0]

    # Fold 1/sqrt(d) into the small Q tile (tq*D muls) instead of scaling the
    # (tq, Lk) scores tensor.
    inv_sqrt_d = 1.0 / math.sqrt(float(d))
    q = (q_ref[...].astype(jnp.float32) * inv_sqrt_d).astype(compute_dtype)
    k = k_ref[...].astype(compute_dtype)

    # scores = (Q / sqrt(d)) @ K^T  -- single 2-D MXU pass, f32 accumulation.
    scores = jax.lax.dot_general(
        q, k, dimension_numbers=(((1,), (1,)), ((), ())),
        preferred_element_type=jnp.float32)                  # (tq, Lk_pad) f32

    # masked_softmax: kv positions >= valid_len -> -1e6 (torch semantics);
    # columns that exist only because of Lk padding are excluded entirely.
    kv_idx = jax.lax.broadcasted_iota(jnp.int32, (tq, lk_pad), 1)
    scores = jnp.where(kv_idx < vl_ref[...], scores, -1e6)
    if lk_pad != lk_valid:
        scores = jnp.where(kv_idx < lk_valid, scores, -jnp.inf)

    # Numerically stable softmax, all in f32; reciprocal routed to the EUP.
    m = jnp.max(scores, axis=-1, keepdims=True)
    e = jnp.exp(scores - m)
    denom = jnp.sum(e, axis=-1, keepdims=True)
    attn = e * pl.reciprocal(denom, approx=True)

    # out = dropout(attn) @ V ; dropout is identity in eval mode.
    out = jax.lax.dot_general(
        attn.astype(compute_dtype), v_ref[...].astype(compute_dtype),
        dimension_numbers=(((1,), (0,)), ((), ())),
        preferred_element_type=jnp.float32)                  # (tq, Dv) f32

    out_ref[...] = out.astype(out_ref.dtype)
    attn_ref[...] = attn.astype(attn_ref.dtype)


# ------------------------------- pallas call ---------------------------------
@functools.partial(jax.jit, static_argnames=("tq", "lk_valid", "compute_dtype"))
def _attention_call(q, k, v, vl, *, tq, lk_valid, compute_dtype):
    b, lq_pad, d = q.shape
    _, lk_pad, dv = v.shape
    out_dtype = q.dtype
    in_isz = jnp.dtype(q.dtype).itemsize
    out_isz = jnp.dtype(out_dtype).itemsize

    # Per-step single-buffer VMEM footprint; Pallas double-buffers it.
    per_step = ((tq + lk_pad) * d + lk_pad * dv) * in_isz \
        + tq * 4 + tq * (dv + lk_pad) * out_isz
    # 32 MiB is >= the default scoped limit on v6e/v7x and a raise on v5e;
    # never exceed 48 MiB so we stay safely inside v7x's 64 MiB physical VMEM.
    vmem_limit = int(min(max(32 * 2**20, 3 * per_step), 48 * 2**20))

    kernel = functools.partial(_attention_kernel, lk_valid=lk_valid,
                               compute_dtype=compute_dtype)
    return pl.pallas_call(
        kernel,
        out_shape=(jax.ShapeDtypeStruct((b, lq_pad, dv), out_dtype),
                   jax.ShapeDtypeStruct((b, lq_pad, lk_pad), out_dtype)),
        grid=(b, lq_pad // tq),
        in_specs=[
            pl.BlockSpec((None, tq, d), lambda bi, qi: (bi, qi, 0)),
            pl.BlockSpec((None, lk_pad, d), lambda bi, qi: (bi, 0, 0)),
            pl.BlockSpec((None, lk_pad, dv), lambda bi, qi: (bi, 0, 0)),
            pl.BlockSpec((None, tq, 1), lambda bi, qi: (bi, qi, 0)),
        ],
        out_specs=(
            pl.BlockSpec((None, tq, dv), lambda bi, qi: (bi, qi, 0)),
            pl.BlockSpec((None, tq, lk_pad), lambda bi, qi: (bi, qi, 0)),
        ),
        compiler_params=pltpu.CompilerParams(
            dimension_semantics=("parallel", "parallel"),
            vmem_limit_bytes=vmem_limit),
    )(q, k, v, vl)


# ------------------------------- wrapper -------------------------------------
def _choose_q_tile(lq, lk_pad, d, dv, in_isz, out_isz):
    # Largest power-of-two Lq tile (<=512) whose double-buffered footprint stays
    # well inside scoped VMEM on every generation (v7x: 64 MiB physical).
    budget = 6 * 2**20                       # per buffer set; x2 for double buffering
    fixed = lk_pad * (d + dv) * in_isz       # K/V blocks (reused across q tiles)
    per_row = d * in_isz + 4 + (dv + lk_pad) * out_isz
    tq = 512
    while tq > 8 and fixed + tq * per_row > budget:
        tq //= 2
    return min(tq, _round_up(lq, 8))


def dot_product_attention(queries, keys, values, valid_lens=None, *,
                          compute_dtype=jnp.bfloat16, q_tile=None):
    """JAX/Pallas equivalent of DotProductAttention.forward (eval mode).

    compute_dtype: dtype fed to the two MXU matmuls (accumulation and softmax
    are always f32). jnp.bfloat16 (default) is MXU-native on v5e/v6e/v7x;
    use jnp.float32 for a bit-faithful path.
    Returns (output, attention_weights).
    """
    b, lq, d = queries.shape
    _, lk, dv = values.shape
    in_isz = jnp.dtype(queries.dtype).itemsize
    out_isz = in_isz

    # Lane-dense attn writeback: pad Lk to a multiple of 128 (padded columns are
    # excluded from the softmax inside the kernel and sliced off below).
    lk_pad = _round_up(lk, 128)
    if q_tile is None:
        tq = _choose_q_tile(lq, lk_pad, d, dv, in_isz, out_isz)
    else:
        tq = min(_round_up(q_tile, 8), _round_up(lq, 8))
    lq_pad = _round_up(lq, tq)

    # Valid kv length per (batch, query) row, mirroring torch masked_softmax.
    if valid_lens is None:
        vl = jnp.full((b, lq), lk, dtype=jnp.int32)
    elif valid_lens.ndim == 1:
        # torch.repeat_interleave(valid_lens, num_queries)
        vl = jnp.broadcast_to(valid_lens.astype(jnp.int32)[:, None], (b, lq))
    else:
        vl = valid_lens.astype(jnp.int32).reshape(b, lq)
    if lq_pad != lq:
        vl = jnp.pad(vl, ((0, 0), (0, lq_pad - lq)), constant_values=lk)
    vl = vl[..., None]                                      # (B, Lq_pad, 1)

    # Inputs keep their own dtype (no forced f32 upcast) so bf16 callers keep
    # half the HBM traffic; the kernel casts per-tile for the MXU.
    q, k, v = queries, keys, values
    if lq_pad != lq:
        q = jnp.pad(q, ((0, 0), (0, lq_pad - lq), (0, 0)))
    if lk_pad != lk:
        k = jnp.pad(k, ((0, 0), (0, lk_pad - lk), (0, 0)))
        v = jnp.pad(v, ((0, 0), (0, lk_pad - lk), (0, 0)))

    out, attn = _attention_call(q, k, v, vl, tq=tq, lk_valid=lk,
                                compute_dtype=compute_dtype)
    return out[:, :lq, :], attn[:, :lq, :lk]


# ---------------------------- pure-JAX reference -----------------------------
def reference(q, k, v, valid_lens=None):
    P = jax.lax.Precision.HIGHEST
    d = q.shape[-1]
    scores = jnp.einsum("bqd,bkd->bqk", q, k, precision=P) / math.sqrt(float(d))
    if valid_lens is not None:
        if valid_lens.ndim == 1:
            vl = jnp.broadcast_to(valid_lens[:, None], scores.shape[:2])
        else:
            vl = valid_lens.reshape(scores.shape[:2])
        kv_idx = jnp.arange(scores.shape[-1])[None, None, :]
        scores = jnp.where(kv_idx < vl[:, :, None], scores, -1e6)
    attn = jax.nn.softmax(scores, axis=-1)
    out = jnp.einsum("bqk,bkd->bqd", attn, v, precision=P)
    return out, attn


# --------------------------------- main --------------------------------------
if __name__ == "__main__":
    B, Lq, Lk, D, Dv = 2, 8, 8, 32, 32

    key = jax.random.PRNGKey(0)
    kq, kk, kv, kvl = jax.random.split(key, 4)
    q = jax.random.normal(kq, (B, Lq, D), jnp.float32)
    k = jax.random.normal(kk, (B, Lk, D), jnp.float32)
    v = jax.random.normal(kv, (B, Lk, Dv), jnp.float32)
    valid_lens = jnp.array([3, 6], jnp.int32)

    # 1) bit-faithful path (f32 matmuls), no mask
    out, attn = dot_product_attention(q, k, v, compute_dtype=jnp.float32)
    jax.block_until_ready((out, attn))
    ref_out, ref_attn = reference(q, k, v, None)
    assert out.shape == (B, Lq, Dv) and attn.shape == (B, Lq, Lk)
    assert jnp.allclose(out, ref_out, atol=2e-3, rtol=2e-3), "output mismatch"
    assert jnp.allclose(attn, ref_attn, atol=2e-3, rtol=2e-3), "attention mismatch"

    # 2) bit-faithful path with 1-D valid_lens (masked_softmax)
    out_m, attn_m = dot_product_attention(q, k, v, valid_lens,
                                          compute_dtype=jnp.float32)
    jax.block_until_ready((out_m, attn_m))
    ref_out_m, ref_attn_m = reference(q, k, v, valid_lens)
    assert jnp.allclose(out_m, ref_out_m, atol=2e-3, rtol=2e-3), "masked output mismatch"
    assert jnp.allclose(attn_m, ref_attn_m, atol=2e-3, rtol=2e-3), "masked attention mismatch"

    # 3) default optimized path: bf16 MXU inputs, f32 accumulation/softmax
    out_b, attn_b = dot_product_attention(q, k, v, valid_lens)
    jax.block_until_ready((out_b, attn_b))
    assert jnp.allclose(out_b, ref_out_m, atol=5e-2, rtol=5e-2), "bf16 output mismatch"
    assert jnp.allclose(attn_b, ref_attn_m, atol=5e-2, rtol=5e-2), "bf16 attention mismatch"

    # 4) multi-tile grid + Lq/Lk padding + 2-D valid_lens (incl. fully masked row)
    B3, Lq3, Lk3, D3, Dv3 = 2, 20, 40, 32, 16
    k3a, k3b, k3c, k3d = jax.random.split(jax.random.PRNGKey(1), 4)
    q3 = jax.random.normal(k3a, (B3, Lq3, D3), jnp.float32)
    k3 = jax.random.normal(k3b, (B3, Lk3, D3), jnp.float32)
    v3 = jax.random.normal(k3c, (B3, Lk3, Dv3), jnp.float32)
    vl3 = jax.random.randint(k3d, (B3, Lq3), 0, Lk3 + 1).astype(jnp.int32)
    vl3 = vl3.at[0, 0].set(0)          # fully masked row -> uniform 1/Lk, like torch
    out3, attn3 = dot_product_attention(q3, k3, v3, vl3,
                                        compute_dtype=jnp.float32, q_tile=8)
    jax.block_until_ready((out3, attn3))
    ref_out3, ref_attn3 = reference(q3, k3, v3, vl3)
    assert out3.shape == (B3, Lq3, Dv3) and attn3.shape == (B3, Lq3, Lk3)
    assert jnp.allclose(out3, ref_out3, atol=2e-3, rtol=2e-3), "tiled output mismatch"
    assert jnp.allclose(attn3, ref_attn3, atol=2e-3, rtol=2e-3), "tiled attention mismatch"

    print("KERNEL_OK")
</pallas_src>

<mosaic_0001>
module attributes {stable_mosaic.version = 11 : i64} {
  func.func @_attention_kernel(%arg0: i32, %arg1: i32, %arg2: memref<1x8x32xf32, #tpu.memory_space<vmem>>, %arg3: memref<1x128x32xf32, #tpu.memory_space<vmem>>, %arg4: memref<1x128x32xf32, #tpu.memory_space<vmem>>, %arg5: memref<1x8x1xi32, #tpu.memory_space<vmem>>, %arg6: memref<1x8x32xf32, #tpu.memory_space<vmem>>, %arg7: memref<1x8x128xf32, #tpu.memory_space<vmem>>) attributes {dimension_semantics = [#tpu.dimension_semantics<parallel>, #tpu.dimension_semantics<parallel>], iteration_bounds = array<i64: 2, 1>, scalar_prefetch = 0 : i64, scratch_operands = 0 : i64, tpu.core_type = #tpu.core_type<tc>, window_params = [{transform_indices = @transform_0, window_bounds = array<i64: 1, 8, 32>}, {transform_indices = @transform_1, window_bounds = array<i64: 1, 128, 32>}, {transform_indices = @transform_2, window_bounds = array<i64: 1, 128, 32>}, {transform_indices = @transform_3, window_bounds = array<i64: 1, 8, 1>}, {transform_indices = @transform_4, window_bounds = array<i64: 1, 8, 32>}, {transform_indices = @transform_5, window_bounds = array<i64: 1, 8, 128>}]} {
    %c0 = arith.constant 0 : index
    %c0_0 = arith.constant 0 : index
    %c0_1 = arith.constant 0 : index
    %0 = vector.load %arg2[%c0, %c0_0, %c0_1] : memref<1x8x32xf32, #tpu.memory_space<vmem>>, vector<1x8x32xf32>
    %1 = vector.shape_cast %0 : vector<1x8x32xf32> to vector<8x32xf32>
    %cst = arith.constant 0.176776692 : f32
    %2 = vector.broadcast %cst : f32 to vector<8x32xf32>
    %3 = arith.mulf %1, %2 : vector<8x32xf32>
    %c0_2 = arith.constant 0 : index
    %c0_3 = arith.constant 0 : index
    %c0_4 = arith.constant 0 : index
    %4 = vector.load %arg3[%c0_2, %c0_3, %c0_4] : memref<1x128x32xf32, #tpu.memory_space<vmem>>, vector<1x128x32xf32>
    %5 = vector.shape_cast %4 : vector<1x128x32xf32> to vector<128x32xf32>
    %cst_5 = arith.constant dense<0.000000e+00> : vector<8x128xf32>
    %6 = tpu.matmul %3, %5, %cst_5 {dimension_numbers = #tpu.dot_dimension_numbers<[1], [1], [0], [0], [0, 0, 1, 0], [], []>} : vector<8x32xf32>, vector<128x32xf32>, vector<8x128xf32> -> vector<8x128xf32>
    %7 = tpu.iota {dimensions = array<i32: 1>} : vector<8x128xi32>
    %c0_6 = arith.constant 0 : index
    %c0_7 = arith.constant 0 : index
    %c0_8 = arith.constant 0 : index
    %8 = vector.load %arg5[%c0_6, %c0_7, %c0_8] : memref<1x8x1xi32, #tpu.memory_space<vmem>>, vector<1x8x1xi32>
    %9 = vector.shape_cast %8 : vector<1x8x1xi32> to vector<8x1xi32>
    %10 = vector.broadcast %9 : vector<8x1xi32> to vector<8x128xi32>
    %11 = arith.cmpi slt, %7, %10 : vector<8x128xi32>
    %cst_9 = arith.constant -1.000000e+06 : f32
    %12 = vector.broadcast %cst_9 : f32 to vector<8x128xf32>
    %13 = arith.select %11, %6, %12 : vector<8x128xi1>, vector<8x128xf32>
    %c8_i32 = arith.constant 8 : i32
    %14 = vector.broadcast %c8_i32 : i32 to vector<8x128xi32>
    %15 = arith.cmpi slt, %7, %14 : vector<8x128xi32>
    %cst_10 = arith.constant 0xFF800000 : f32
    %16 = vector.broadcast %cst_10 : f32 to vector<8x128xf32>
    %17 = arith.select %15, %13, %16 : vector<8x128xi1>, vector<8x128xf32>
    %cst_11 = arith.constant dense<0xFF800000> : vector<8xf32>
    %18 = vector.multi_reduction <maximumf>, %17, %cst_11 [1] : vector<8x128xf32> to vector<8xf32>
    %19 = vector.shape_cast %18 : vector<8xf32> to vector<8x1xf32>
    %20 = vector.broadcast %19 : vector<8x1xf32> to vector<8x128xf32>
    %21 = arith.subf %17, %20 : vector<8x128xf32>
    %22 = math.exp %21 : vector<8x128xf32>
    %cst_12 = arith.constant dense<0.000000e+00> : vector<8xf32>
    %23 = vector.multi_reduction <add>, %22, %cst_12 [1] : vector<8x128xf32> to vector<8xf32>
    %24 = vector.shape_cast %23 : vector<8xf32> to vector<8x1xf32>
    %25 = tpu.reciprocal %24 {approx = true} : vector<8x1xf32> -> vector<8x1xf32>
    %26 = vector.broadcast %25 : vector<8x1xf32> to vector<8x128xf32>
    %27 = arith.mulf %22, %26 : vector<8x128xf32>
    %c0_13 = arith.constant 0 : index
    %c0_14 = arith.constant 0 : index
    %c0_15 = arith.constant 0 : index
    %28 = vector.load %arg4[%c0_13, %c0_14, %c0_15] : memref<1x128x32xf32, #tpu.memory_space<vmem>>, vector<1x128x32xf32>
    %29 = vector.shape_cast %28 : vector<1x128x32xf32> to vector<128x32xf32>
    %cst_16 = arith.constant dense<0.000000e+00> : vector<8x32xf32>
    %30 = tpu.matmul %27, %29, %cst_16 {dimension_numbers = #tpu.dot_dimension_numbers<[1], [0], [0], [1], [0, 0, 1, 1], [], []>} : vector<8x128xf32>, vector<128x32xf32>, vector<8x32xf32> -> vector<8x32xf32>
    %c0_17 = arith.constant 0 : index
    %c0_18 = arith.constant 0 : index
    %c0_19 = arith.constant 0 : index
    %31 = vector.load %arg6[%c0_17, %c0_18, %c0_19] : memref<1x8x32xf32, #tpu.memory_space<vmem>>, vector<1x8x32xf32>
    %32 = vector.shape_cast %31 : vector<1x8x32xf32> to vector<8x32xf32>
    %33 = vector.shape_cast %30 : vector<8x32xf32> to vector<1x8x32xf32>
    tpu.vector_store %arg6[%c0_17, %c0_18, %c0_19], %33 {strides = array<i32>} : memref<1x8x32xf32, #tpu.memory_space<vmem>>, vector<1x8x32xf32>,
    %c0_20 = arith.constant 0 : index
    %c0_21 = arith.constant 0 : index
    %c0_22 = arith.constant 0 : index
    %34 = vector.load %arg7[%c0_20, %c0_21, %c0_22] : memref<1x8x128xf32, #tpu.memory_space<vmem>>, vector<1x8x128xf32>
    %35 = vector.shape_cast %34 : vector<1x8x128xf32> to vector<8x128xf32>
    %36 = vector.shape_cast %27 : vector<8x128xf32> to vector<1x8x128xf32>
    tpu.vector_store %arg7[%c0_20, %c0_21, %c0_22], %36 {strides = array<i32>} : memref<1x8x128xf32, #tpu.memory_space<vmem>>, vector<1x8x128xf32>,
    return
  }
  func.func @transform_0(%arg0: i32, %arg1: i32) -> (i32, i32, i32) {
    %c0_i32 = arith.constant 0 : i32
    %c0_i32_0 = arith.constant 0 : i32
    return %arg0, %arg1, %c0_i32 : i32, i32, i32
  }
  func.func @transform_1(%arg0: i32, %arg1: i32) -> (i32, i32, i32) {
    %c0_i32 = arith.constant 0 : i32
    %c0_i32_0 = arith.constant 0 : i32
    %c0_i32_1 = arith.constant 0 : i32
    return %arg0, %c0_i32, %c0_i32_0 : i32, i32, i32
  }
  func.func @transform_2(%arg0: i32, %arg1: i32) -> (i32, i32, i32) {
    %c0_i32 = arith.constant 0 : i32
    %c0_i32_0 = arith.constant 0 : i32
    %c0_i32_1 = arith.constant 0 : i32
    return %arg0, %c0_i32, %c0_i32_0 : i32, i32, i32
  }
  func.func @transform_3(%arg0: i32, %arg1: i32) -> (i32, i32, i32) {
    %c0_i32 = arith.constant 0 : i32
    %c0_i32_0 = arith.constant 0 : i32
    return %arg0, %arg1, %c0_i32 : i32, i32, i32
  }
  func.func @transform_4(%arg0: i32, %arg1: i32) -> (i32, i32, i32) {
    %c0_i32 = arith.constant 0 : i32
    %c0_i32_0 = arith.constant 0 : i32
    return %arg0, %arg1, %c0_i32 : i32, i32, i32
  }
  func.func @transform_5(%arg0: i32, %arg1: i32) -> (i32, i32, i32) {
    %c0_i32 = arith.constant 0 : i32
    %c0_i32_0 = arith.constant 0 : i32
    return %arg0, %arg1, %c0_i32 : i32, i32, i32
  }
}

</mosaic_0001>

<llo_original>
// kernel: _attention_call.1
$region0: #{_attention_call.1}
  #allocation0 [shape = 'u32[]', space=smem, size = 0x4, offset = 0x4, fixed_abs, tag = 'smem constant byte address 0x4 - core index']
  #allocation1 [shape = 'u32[144,128]{1,0:T(1,128)}', space=vmem, size = 0x12000, scoped, tag = 'internal scratch']
  %s0 = inlined_call_operand.vmem [shape: f32[2,8,32], index: 0, kind: input, shape index: {}]
  %s1 = inlined_call_operand.vmem [shape: f32[2,128,32], index: 1, kind: input, shape index: {}]
  %s2 = inlined_call_operand.vmem [shape: f32[2,128,32], index: 2, kind: input, shape index: {}]
  %s3 = inlined_call_operand.vmem [shape: s32[2,8,1], index: 3, kind: input, shape index: {}]
  %s4 = inlined_call_operand.hbm [shape: f32[2,8,32], index: 4, kind: output, shape index: {0}]
  %s5 = inlined_call_operand.hbm [shape: f32[2,8,128], index: 5, kind: output, shape index: {1}]
  %6 = xla_tuple %s4, %s5
  %s7 = sld [smem:[#allocation0]]
  $region57: #{_attention_call.1} parent=0
    _
  %s9 = ssub.s32 1, %s7
  %s10 = scalar_select 0, %s9, %s7
  $region1: #{_attention_call.1} parent=0
    #allocation2 [shape = 'u8[8192]{0}', space=vmem, size = 0x2000, scoped, tag = 'output window, operand 0']
    #allocation3 [shape = 's32[2]{0}', space=sflag, size = 0x8, scoped, tag = 'scoped memory for _attention_call.1']
    #allocation4 [shape = 'u8[8192]{0}', space=vmem, size = 0x2000, scoped, tag = 'output window, operand 1']
    #allocation5 [shape = 's32[2]{0}', space=sflag, size = 0x8, scoped, tag = 'scoped memory for _attention_call.1']
    %11 = vsyncpa [#allocation3], 0
    %s12 = scalar_lea.sflag [#allocation3], 1
    %13 = vsyncpa %s12, 0
    %14 = vsyncpa [#allocation5], 0
    %s15 = scalar_lea.sflag [#allocation5], 1
    %16 = vsyncpa %s15, 0
    loop: start=0, step=1, limit=4
    $region2: #{_attention_call.1} parent=1 // loop_pre_header
      _
    $region3: #{_attention_call.1} parent=1 // loop_header
      %s18 = sphi 0, %s22
      %p19 = scmp.ge.s32.totalorder %s18, 4
      %s25 = sphi 0, %s37
      %s26 = sphi 0, %s33
      %s27 = sphi 0, %s25
      %s28 = sphi 0, %s26
      %s29 = sphi 0, %s27
      %s30 = sphi 0, %s28
      %s42 = sphi 0, %s44
      %s45 = sphi 0, %s42
      %s46 = sphi 0, %s45
      %s62 = sphi 0, %s46
      %s68 = sphi 0, %s70
      %s71 = sphi 0, %s68
      %s72 = sphi 0, %s71
      %s88 = sphi 0, %s72
      %s94 = sphi 0, %s96
      %s97 = sphi 0, %s94
      %s98 = sphi 0, %s97
      %s114 = sphi 0, %s98
      %s122 = sphi 0, %s124
      %s125 = sphi 0, %s122
      %s126 = sphi 0, %s125
      %s142 = sphi 0, %s126
      %s150 = sphi 0, %s152
      %s153 = sphi 0, %s150
      %s154 = sphi 0, %s153
      %s170 = sphi 0, %s154
      %s178 = sphi 0, %s180
      %s181 = sphi 0, %s178
      %s182 = sphi 0, %s181
      %s198 = sphi 0, %s182
    $region4: #{_attention_call.1} parent=1 // loop_header_branch
      %21 = sbr.rel (%p19) target = $region8
    $region5: #{_attention_call.1} parent=1 // loop_body
      %s23 = ssub.s32 %s18, 1
      %s24 = ssub.s32 %s18, 2
      %s31 = sadd.s32 1, %s26
      %p32 = scmp.ge.s32.totalorder %s31, 1
      %s33 = scalar_select %p32, 0, %s31
      %s34 = sadd.s32 1, %s25
      %s35 = scalar_select %p32, %s34, %s25
      %p36 = scmp.ge.s32.totalorder %s35, 2
      %s37 = scalar_select %p36, 0, %s35
      %s38 = ssub.s32 %s25, %s37
      %s39 = ssub.s32 %s26, %s33
      %s40 = sor.u32 %s38, %s39
      %p41 = scmp.eq.s32.totalorder %s40, 0
      %s43 = sadd.s32 %s42, 1
      %s44 = scalar_select %p41, %s42, %s43
      %p47 = pneg %p41
      %p48 = scmp.eq.s32.totalorder %s18, 1
      %p49 = por %p47, %p48
      %p50 = scmp.ne.s32.totalorder %s42, %s45
      %p51 = scmp.eq.s32.totalorder %s18, 0
      %p52 = por %p50, %p51
      %p53 = scmp.ne.s32.totalorder %s42, %s45
      %p54 = scmp.eq.s32.totalorder %s23, 1
      %p55 = por %p53, %p54
      %p56 = scmp.ne.s32.totalorder %s45, %s46
      %p57 = scmp.eq.s32.totalorder %s23, 0
      %p58 = por %p56, %p57
      %p59 = scmp.ne.s32.totalorder %s45, %s46
      %p60 = scmp.eq.s32.totalorder %s24, 1
      %p61 = por %p59, %p60
      %p63 = scmp.ne.s32.totalorder %s46, %s62
      %p64 = scmp.eq.s32.totalorder %s24, 0
      %p65 = por %p63, %p64
      %s66 = ssub.s32 %s25, %s37
      %p67 = scmp.eq.s32.totalorder %s66, 0
      %s69 = sadd.s32 %s68, 1
      %s70 = scalar_select %p67, %s68, %s69
      %p73 = pneg %p67
      %p74 = scmp.eq.s32.totalorder %s18, 1
      %p75 = por %p73, %p74
      %p76 = scmp.ne.s32.totalorder %s68, %s71
      %p77 = scmp.eq.s32.totalorder %s18, 0
      %p78 = por %p76, %p77
      %p79 = scmp.ne.s32.totalorder %s68, %s71
      %p80 = scmp.eq.s32.totalorder %s23, 1
      %p81 = por %p79, %p80
      %p82 = scmp.ne.s32.totalorder %s71, %s72
      %p83 = scmp.eq.s32.totalorder %s23, 0
      %p84 = por %p82, %p83
      %p85 = scmp.ne.s32.totalorder %s71, %s72
      %p86 = scmp.eq.s32.totalorder %s24, 1
      %p87 = por %p85, %p86
      %p89 = scmp.ne.s32.totalorder %s72, %s88
      %p90 = scmp.eq.s32.totalorder %s24, 0
      %p91 = por %p89, %p90
      %s92 = ssub.s32 %s25, %s37
      %p93 = scmp.eq.s32.totalorder %s92, 0
      %s95 = sadd.s32 %s94, 1
      %s96 = scalar_select %p93, %s94, %s95
      %p99 = pneg %p93
      %p100 = scmp.eq.s32.totalorder %s18, 1
      %p101 = por %p99, %p100
      %p102 = scmp.ne.s32.totalorder %s94, %s97
      %p103 = scmp.eq.s32.totalorder %s18, 0
      %p104 = por %p102, %p103
      %p105 = scmp.ne.s32.totalorder %s94, %s97
      %p106 = scmp.eq.s32.totalorder %s23, 1
      %p107 = por %p105, %p106
      %p108 = scmp.ne.s32.totalorder %s97, %s98
      %p109 = scmp.eq.s32.totalorder %s23, 0
      %p110 = por %p108, %p109
      %p111 = scmp.ne.s32.totalorder %s97, %s98
      %p112 = scmp.eq.s32.totalorder %s24, 1
      %p113 = por %p111, %p112
      %p115 = scmp.ne.s32.totalorder %s98, %s114
      %p116 = scmp.eq.s32.totalorder %s24, 0
      %p117 = por %p115, %p116
      %s118 = ssub.s32 %s25, %s37
      %s119 = ssub.s32 %s26, %s33
      %s120 = sor.u32 %s118, %s119
      %p121 = scmp.eq.s32.totalorder %s120, 0
      %s123 = sadd.s32 %s122, 1
      %s124 = scalar_select %p121, %s122, %s123
      %p127 = pneg %p121
      %p128 = scmp.eq.s32.totalorder %s18, 1
      %p129 = por %p127, %p128
      %p130 = scmp.ne.s32.totalorder %s122, %s125
      %p131 = scmp.eq.s32.totalorder %s18, 0
      %p132 = por %p130, %p131
      %p133 = scmp.ne.s32.totalorder %s122, %s125
      %p134 = scmp.eq.s32.totalorder %s23, 1
      %p135 = por %p133, %p134
      %p136 = scmp.ne.s32.totalorder %s125, %s126
      %p137 = scmp.eq.s32.totalorder %s23, 0
      %p138 = por %p136, %p137
      %p139 = scmp.ne.s32.totalorder %s125, %s126
      %p140 = scmp.eq.s32.totalorder %s24, 1
      %p141 = por %p139, %p140
      %p143 = scmp.ne.s32.totalorder %s126, %s142
      %p144 = scmp.eq.s32.totalorder %s24, 0
      %p145 = por %p143, %p144
      %s146 = ssub.s32 %s25, %s37
      %s147 = ssub.s32 %s26, %s33
      %s148 = sor.u32 %s146, %s147
      %p149 = scmp.eq.s32.totalorder %s148, 0
      %s151 = sadd.s32 %s150, 1
      %s152 = scalar_select %p149, %s150, %s151
      %p155 = pneg %p149
      %p156 = scmp.eq.s32.totalorder %s18, 1
      %p157 = por %p155, %p156
      %p158 = scmp.ne.s32.totalorder %s150, %s153
      %p159 = scmp.eq.s32.totalorder %s18, 0
      %p160 = por %p158, %p159
      %p161 = scmp.ne.s32.totalorder %s150, %s153
      %p162 = scmp.eq.s32.totalorder %s23, 1
      %p163 = por %p161, %p162
      %p164 = scmp.ne.s32.totalorder %s153, %s154
      %p165 = scmp.eq.s32.totalorder %s23, 0
      %p166 = por %p164, %p165
      %p167 = scmp.ne.s32.totalorder %s153, %s154
      %p168 = scmp.eq.s32.totalorder %s24, 1
      %p169 = por %p167, %p168
      %p171 = scmp.ne.s32.totalorder %s154, %s170
      %p172 = scmp.eq.s32.totalorder %s24, 0
      %p173 = por %p171, %p172
      %s174 = ssub.s32 %s25, %s37
      %s175 = ssub.s32 %s26, %s33
      %s176 = sor.u32 %s174, %s175
      %p177 = scmp.eq.s32.totalorder %s176, 0
      %s179 = sadd.s32 %s178, 1
      %s180 = scalar_select %p177, %s178, %s179
      %p183 = pneg %p177
      %p184 = scmp.eq.s32.totalorder %s18, 1
      %p185 = por %p183, %p184
      %p186 = scmp.ne.s32.totalorder %s178, %s181
      %p187 = scmp.eq.s32.totalorder %s18, 0
      %p188 = por %p186, %p187
      %p189 = scmp.ne.s32.totalorder %s178, %s181
      %p190 = scmp.eq.s32.totalorder %s23, 1
      %p191 = por %p189, %p190
      %p192 = scmp.ne.s32.totalorder %s181, %s182
      %p193 = scmp.eq.s32.totalorder %s23, 0
      %p194 = por %p192, %p193
      %p195 = scmp.ne.s32.totalorder %s181, %s182
      %p196 = scmp.eq.s32.totalorder %s24, 1
      %p197 = por %p195, %p196
      %p199 = scmp.ne.s32.totalorder %s182, %s198
      %p200 = scmp.eq.s32.totalorder %s24, 0
      %p201 = por %p199, %p200
      %p202 = scmp.le.s32.totalorder 1, %s18
      %p203 = scmp.lt.s32.totalorder %s18, 3
      %p204 = pnand %p202, %p203
      %p205 = pneg %p204
      // Predicated region
      $region9: #{_attention_call.1} parent=5 // pred_check
        _
      $region10: #{_attention_call.1} parent=5 // pred_check_branch
        %207 = sbr.rel (%p204) target = $region12
      $region11: #{_attention_call.1} parent=5 // pred_region
        %s208 = ssub.s32 %s18, 1
      $region12: #{_attention_call.1} parent=5 // pred_fallthru
        _
      %p209 = scmp.lt.s32.totalorder %s18, 2
      // Predicated region
      $region13: #{_attention_call.1} parent=5 // pred_check
        %p210 = pneg %p209
      $region14: #{_attention_call.1} parent=5 // pred_check_branch
        %212 = sbr.rel (%p210) target = $region16
      $region15: #{_attention_call.1} parent=5 // pred_region
        // Predicated region
        $region17: #{_attention_call.1} parent=15 // pred_check
          %p213 = pneg %p52
        $region18: #{_attention_call.1} parent=15 // pred_check_branch
          %215 = sbr.rel (%p213) target = $region20
        $region19: #{_attention_call.1} parent=15 // pred_region
          %p216 = scmp.lt.s32.totalorder %s25, 1
          %s217 = scalar_select %p216, %s25, 1
          %p218 = scmp.lt.s32.totalorder %s26, 0
          %s219 = scalar_select %p218, %s26, 0
          %s220 = sadd.s32 %s219, %s217
          %s221 = smul.addr %s220, 8
          %s222 = scalar_lea.vmem %s0, %s221
        $region20: #{_attention_call.1} parent=15 // pred_fallthru
          _
        // Predicated region
        $region21: #{_attention_call.1} parent=15 // pred_check
          %p223 = pneg %p78
        $region22: #{_attention_call.1} parent=15 // pred_check_branch
          %225 = sbr.rel (%p223) target = $region24
        $region23: #{_attention_call.1} parent=15 // pred_region
          %p226 = scmp.lt.s32.totalorder %s25, 1
          %s227 = scalar_select %p226, %s25, 1
          %s228 = smul.addr %s227, 16
          %s229 = smul.addr %s228, 8
          %s230 = scalar_lea.vmem %s1, %s229
        $region24: #{_attention_call.1} parent=15 // pred_fallthru
          _
        // Predicated region
        $region25: #{_attention_call.1} parent=15 // pred_check
          %p231 = pneg %p104
        $region26: #{_attention_call.1} parent=15 // pred_check_branch
          %233 = sbr.rel (%p231) target = $region28
        $region27: #{_attention_call.1} parent=15 // pred_region
          %p234 = scmp.lt.s32.totalorder %s25, 1
          %s235 = scalar_select %p234, %s25, 1
          %s236 = smul.addr %s235, 16
          %s237 = smul.addr %s236, 8
          %s238 = scalar_lea.vmem %s2, %s237
        $region28: #{_attention_call.1} parent=15 // pred_fallthru
          _
        // Predicated region
        $region29: #{_attention_call.1} parent=15 // pred_check
          %p239 = pneg %p132
        $region30: #{_attention_call.1} parent=15 // pred_check_branch
          %241 = sbr.rel (%p239) target = $region32
        $region31: #{_attention_call.1} parent=15 // pred_region
          %p242 = scmp.lt.s32.totalorder %s25, 1
          %s243 = scalar_select %p242, %s25, 1
          %p244 = scmp.lt.s32.totalorder %s26, 0
          %s245 = scalar_select %p244, %s26, 0
          %s246 = sadd.s32 %s245, %s243
          %s247 = smul.addr %s246, 8
          %s248 = scalar_lea.vmem %s3, %s247
        $region32: #{_attention_call.1} parent=15 // pred_fallthru
          _
      $region16: #{_attention_call.1} parent=5 // pred_fallthru
        _
      %p249 = scmp.le.s32.totalorder 1, %s18
      %p250 = scmp.lt.s32.totalorder %s18, 3
      %p251 = pnand %p249, %p250
      %p252 = pneg %p251
      // Predicated region
      $region33: #{_attention_call.1} parent=5 // pred_check
        _
      $region34: #{_attention_call.1} parent=5 // pred_check_branch
        %254 = sbr.rel (%p251) target = $region36
      $region35: #{_attention_call.1} parent=5 // pred_region
        %s255 = ssub.s32 %s18, 1
        %p256 = scmp.lt.s32.totalorder %s27, 1
        %s257 = scalar_select %p256, %s27, 1
        %p258 = scmp.lt.s32.totalorder %s28, 0
        %s259 = scalar_select %p258, %s28, 0
        %s260 = sadd.s32 %s259, %s257
        %s261 = smul.addr %s260, 8
        %s262 = scalar_lea.vmem %s0, %s261
        %p263 = pneg %p58
        %p264 = pneg %p55
        %p265 = scmp.lt.s32.totalorder %s27, 1
        %s266 = scalar_select %p265, %s27, 1
        %s267 = smul.addr %s266, 16
        %s268 = smul.addr %s267, 8
        %s269 = scalar_lea.vmem %s1, %s268
        %p270 = pneg %p84
        %p271 = pneg %p81
        %p272 = scmp.lt.s32.totalorder %s27, 1
        %s273 = scalar_select %p272, %s27, 1
        %s274 = smul.addr %s273, 16
        %s275 = smul.addr %s274, 8
        %s276 = scalar_lea.vmem %s2, %s275
        %p277 = pneg %p110
        %p278 = pneg %p107
        %p279 = scmp.lt.s32.totalorder %s27, 1
        %s280 = scalar_select %p279, %s27, 1
        %p281 = scmp.lt.s32.totalorder %s28, 0
        %s282 = scalar_select %p281, %s28, 0
        %s283 = sadd.s32 %s282, %s280
        %s284 = smul.addr %s283, 8
        %s285 = scalar_lea.vmem %s3, %s284
        %p286 = pneg %p138
        %p287 = pneg %p135
        %p288 = pneg %p166
        %p289 = pneg %p163
        %s290 = sand.u32 %s153, 1
        %s291 = scalar_lea.sflag [#allocation3], %s290
        %s292 = sand.u32 %s153, 1
        %s293 = smul.addr %s292, 8
        %s294 = scalar_lea.vmem [#allocation2], %s293
        %p295 = pneg %p194
        %p296 = pneg %p191
        %s297 = sand.u32 %s181, 1
        %s298 = scalar_lea.sflag [#allocation5], %s297
        %s299 = sand.u32 %s181, 1
        %s300 = smul.addr %s299, 8
        %s301 = scalar_lea.vmem [#allocation4], %s300
        %p302 = scmp.lt.s32.totalorder %s27, 1
        %s303 = scalar_select %p302, %s27, 1
        %p304 = scmp.lt.s32.totalorder %s28, 0
        %s305 = scalar_select %p304, %s28, 0
        %s306 = sadd.s32 %s305, %s303
        %s307 = smul.addr %s306, 8
        %s308 = scalar_lea.vmem %s0, %s307
        %p309 = scmp.lt.s32.totalorder %s27, 1
        %s310 = scalar_select %p309, %s27, 1
        %s311 = smul.addr %s310, 16
        %s312 = smul.addr %s311, 8
        %s313 = scalar_lea.vmem %s1, %s312
        %p314 = scmp.lt.s32.totalorder %s27, 1
        %s315 = scalar_select %p314, %s27, 1
        %s316 = smul.addr %s315, 16
        %s317 = smul.addr %s316, 8
        %s318 = scalar_lea.vmem %s2, %s317
        %p319 = scmp.lt.s32.totalorder %s27, 1
        %s320 = scalar_select %p319, %s27, 1
        %p321 = scmp.lt.s32.totalorder %s28, 0
        %s322 = scalar_select %p321, %s28, 0
        %s323 = sadd.s32 %s322, %s320
        %s324 = smul.addr %s323, 8
        %s325 = scalar_lea.vmem %s3, %s324
        %v326 = vld [vmem:[%s308] sm:$0xff]
        %v327 = vmul.f32 %v326, 0.17677669
        %v328 = vld [vmem:[%s313] sm:$0xff]
        %v329 = vld [vmem:[%s313 + $0x8] sm:$0xff]
        %v330 = vld [vmem:[%s313 + $0x10] sm:$0xff]
        %v331 = vld [vmem:[%s313 + $0x18] sm:$0xff]
        %v332 = vld [vmem:[%s313 + $0x20] sm:$0xff]
        %v333 = vld [vmem:[%s313 + $0x28] sm:$0xff]
        %v334 = vld [vmem:[%s313 + $0x30] sm:$0xff]
        %v335 = vld [vmem:[%s313 + $0x38] sm:$0xff]
        %v336 = vld [vmem:[%s313 + $0x40] sm:$0xff]
        %v337 = vld [vmem:[%s313 + $0x48] sm:$0xff]
        %v338 = vld [vmem:[%s313 + $0x50] sm:$0xff]
        %v339 = vld [vmem:[%s313 + $0x58] sm:$0xff]
        %v340 = vld [vmem:[%s313 + $0x60] sm:$0xff]
        %v341 = vld [vmem:[%s313 + $0x68] sm:$0xff]
        %v342 = vld [vmem:[%s313 + $0x70] sm:$0xff]
        %v343 = vld [vmem:[%s313 + $0x78] sm:$0xff]
        %vm344 = vcmask 261120
        %v346 = vsel %vm344, %v327, 0
        %v349 = vsel %vm344, %v328, 0
        %v352 = vsel %vm344, %v329, 0
        %v355 = vsel %vm344, %v330, 0
        %v358 = vsel %vm344, %v331, 0
        %v361 = vsel %vm344, %v332, 0
        %v364 = vsel %vm344, %v333, 0
        %v367 = vsel %vm344, %v334, 0
        %v370 = vsel %vm344, %v335, 0
        %v373 = vsel %vm344, %v336, 0
        %v376 = vsel %vm344, %v337, 0
        %v379 = vsel %vm344, %v338, 0
        %v382 = vsel %vm344, %v339, 0
        %v385 = vsel %vm344, %v340, 0
        %v388 = vsel %vm344, %v341, 0
        %v391 = vsel %vm344, %v342, 0
        %v394 = vsel %vm344, %v343, 0
        %396 = vmatprep.subr.mxu0 0.0
        %397 = vmatpush1.xpose.msra.mxu0 %v349
        %398 = vmatprep.subr.mxu0 0.0
        %399 = vmatpush1.xpose.msra.mxu0 %v352
        %400 = vmatprep.subr.mxu0 0.0
        %401 = vmatpush1.xpose.msra.mxu0 %v355
        %402 = vmatprep.subr.mxu0 0.0
        %403 = vmatpush1.xpose.msra.mxu0 %v358
        %404 = vmatprep.subr.mxu0 0.0
        %405 = vmatpush1.xpose.msra.mxu0 %v361
        %406 = vmatprep.subr.mxu0 0.0
        %407 = vmatpush1.xpose.msra.mxu0 %v364
        %408 = vmatprep.subr.mxu0 0.0
        %409 = vmatpush1.xpose.msra.mxu0 %v367
        %410 = vmatprep.subr.mxu0 0.0
        %411 = vmatpush1.xpose.msra.mxu0 %v370
        %412 = vmatprep.subr.mxu0 0.0
        %413 = vmatpush1.xpose.msra.mxu0 %v373
        %414 = vmatprep.subr.mxu0 0.0
        %415 = vmatpush1.xpose.msra.mxu0 %v376
        %416 = vmatprep.subr.mxu0 0.0
        %417 = vmatpush1.xpose.msra.mxu0 %v379
        %418 = vmatprep.subr.mxu0 0.0
        %419 = vmatpush1.xpose.msra.mxu0 %v382
        %420 = vmatprep.subr.mxu0 0.0
        %421 = vmatpush1.xpose.msra.mxu0 %v385
        %422 = vmatprep.subr.mxu0 0.0
        %423 = vmatpush1.xpose.msra.mxu0 %v388
        %424 = vmatprep.subr.mxu0 0.0
        %425 = vmatpush1.xpose.msra.mxu0 %v391
        %426 = vmatprep.subr.mxu0 0.0
        %427 = vmatpush1.xpose.msra.mxu0 %v394
        %428 = vmatprep.subr.mxu0 0.0
        %429 = vmatpush1.xpose.msra.mxu0 0.0
        %430 = vmatprep.subr.mxu0 0.0
        %431 = vmatpush1.xpose.msra.mxu0 0.0
        %432 = vmatprep.subr.mxu0 0.0
        %433 = vmatpush1.xpose.msra.mxu0 0.0
        %434 = vmatprep.subr.mxu0 0.0
        %435 = vmatpush1.xpose.msra.mxu0 0.0
        %436 = vmatprep.subr.mxu0 0.0
        %437 = vmatpush1.xpose.msra.mxu0 0.0
        %438 = vmatprep.subr.mxu0 0.0
        %439 = vmatpush1.xpose.msra.mxu0 0.0
        %440 = vmatprep.subr.mxu0 0.0
        %441 = vmatpush1.xpose.msra.mxu0 0.0
        %442 = vmatprep.subr.mxu0 0.0
        %443 = vmatpush1.xpose.msra.mxu0 0.0
        %444 = vmatprep.subr.mxu0 0.0
        %445 = vmatpush1.xpose.msra.mxu0 0.0
        %446 = vmatprep.subr.mxu0 0.0
        %447 = vmatpush1.xpose.msra.mxu0 0.0
        %448 = vmatprep.subr.mxu0 0.0
        %449 = vmatpush1.xpose.msra.mxu0 0.0
        %450 = vmatprep.subr.mxu0 0.0
        %451 = vmatpush1.xpose.msra.mxu0 0.0
        %452 = vmatprep.subr.mxu0 0.0
        %453 = vmatpush1.xpose.msra.mxu0 0.0
        %454 = vmatprep.subr.mxu0 0.0
        %455 = vmatpush1.xpose.msra.mxu0 0.0
        %456 = vmatprep.subr.mxu0 0.0
        %457 = vmatpush1.xpose.msra.mxu0 0.0
        %458 = vmatprep.subr.mxu0 0.0
        %459 = vmatpush1.xpose.msra.mxu0 0.0
        %460 = vmatprep.mubr.f32.mxu0 0.0
        %461 = vmatmul.mubr.f32.gmra.mrb[0].mxu0 %v346
        %v462 = vpop.f32.mrb[0].mxu0
        %v463 = vadd.f32 0.0, %v462
        %v464 = vpop.f32.mrb[0].mxu0
        %465 = vdwg.mxu0
        %v466 = vlaneseq
        %v467 = vand.u32 %v466, 127
        %v468 = vld [vmem:[%s325] sm:$0xff]
        %469 = vset.pattern.permute.xlu0 0
        %470 = vperm.xlu0 %469, %v468
        %v471 = vpop.permute.xlu0 %470
        %vm472 = vcmp.lt.s32.totalorder %v467, %v471
        %v473 = vsel %vm472, %v463, -1000000.0
        %vm474 = vcmp.lt.s32.totalorder %v467, 8
        %v475 = vsel %vm474, %v473, -inf
        %476 = vmax.xlane.f32.xlu0 %v475
        %v477 = vpop.xlane.xlu0 %476
        %v478 = vsub.f32 %v475, %v477
        %v479 = vmul.f32 %v478, 1.442695
        %v480 = vpow.pop %v479
        %481 = vadd.xlane.f32.xlu0 %v480
        %v482 = vpop.xlane.xlu0 %481
        %v483 = vrcp.pop %v482
        %v484 = vmul.f32 %v480, %v483
        %v485 = vld [vmem:[%s318] sm:$0xff]
        %v486 = vld [vmem:[%s318 + $0x8] sm:$0xff]
        %v487 = vld [vmem:[%s318 + $0x10] sm:$0xff]
        %v488 = vld [vmem:[%s318 + $0x18] sm:$0xff]
        %v489 = vld [vmem:[%s318 + $0x20] sm:$0xff]
        %v490 = vld [vmem:[%s318 + $0x28] sm:$0xff]
        %v491 = vld [vmem:[%s318 + $0x30] sm:$0xff]
        %v492 = vld [vmem:[%s318 + $0x38] sm:$0xff]
        %v493 = vld [vmem:[%s318 + $0x40] sm:$0xff]
        %v494 = vld [vmem:[%s318 + $0x48] sm:$0xff]
        %v495 = vld [vmem:[%s318 + $0x50] sm:$0xff]
        %v496 = vld [vmem:[%s318 + $0x58] sm:$0xff]
        %v497 = vld [vmem:[%s318 + $0x60] sm:$0xff]
        %v498 = vld [vmem:[%s318 + $0x68] sm:$0xff]
        %v499 = vld [vmem:[%s318 + $0x70] sm:$0xff]
        %v500 = vld [vmem:[%s318 + $0x78] sm:$0xff]
        %501 = vmatprep.subr.mxu0 0.0
        %502 = vmatpush1.msra.mxu0 %v485
        %503 = vmatprep.subr.mxu0 0.0
        %504 = vmatpush1.msra.mxu0 %v486
        %505 = vmatprep.subr.mxu0 0.0
        %506 = vmatpush1.msra.mxu0 %v487
        %507 = vmatprep.subr.mxu0 0.0
        %508 = vmatpush1.msra.mxu0 %v488
        %509 = vmatprep.subr.mxu0 0.0
        %510 = vmatpush1.msra.mxu0 %v489
        %511 = vmatprep.subr.mxu0 0.0
        %512 = vmatpush1.msra.mxu0 %v490
        %513 = vmatprep.subr.mxu0 0.0
        %514 = vmatpush1.msra.mxu0 %v491
        %515 = vmatprep.subr.mxu0 0.0
        %516 = vmatpush1.msra.mxu0 %v492
        %517 = vmatprep.subr.mxu0 0.0
        %518 = vmatpush1.msra.mxu0 %v493
        %519 = vmatprep.subr.mxu0 0.0
        %520 = vmatpush1.msra.mxu0 %v494
        %521 = vmatprep.subr.mxu0 0.0
        %522 = vmatpush1.msra.mxu0 %v495
        %523 = vmatprep.subr.mxu0 0.0
        %524 = vmatpush1.msra.mxu0 %v496
        %525 = vmatprep.subr.mxu0 0.0
        %526 = vmatpush1.msra.mxu0 %v497
        %527 = vmatprep.subr.mxu0 0.0
        %528 = vmatpush1.msra.mxu0 %v498
        %529 = vmatprep.subr.mxu0 0.0
        %530 = vmatpush1.msra.mxu0 %v499
        %531 = vmatprep.subr.mxu0 0.0
        %532 = vmatpush1.msra.mxu0 %v500
        %533 = vmatprep.subr.mxu0 0.0
        %534 = vmatpush1.msra.mxu0 0.0
        %535 = vmatprep.subr.mxu0 0.0
        %536 = vmatpush1.msra.mxu0 0.0
        %537 = vmatprep.subr.mxu0 0.0
        %538 = vmatpush1.msra.mxu0 0.0
        %539 = vmatprep.subr.mxu0 0.0
        %540 = vmatpush1.msra.mxu0 0.0
        %541 = vmatprep.subr.mxu0 0.0
        %542 = vmatpush1.msra.mxu0 0.0
        %543 = vmatprep.subr.mxu0 0.0
        %544 = vmatpush1.msra.mxu0 0.0
        %545 = vmatprep.subr.mxu0 0.0
        %546 = vmatpush1.msra.mxu0 0.0
        %547 = vmatprep.subr.mxu0 0.0
        %548 = vmatpush1.msra.mxu0 0.0
        %549 = vmatprep.subr.mxu0 0.0
        %550 = vmatpush1.msra.mxu0 0.0
        %551 = vmatprep.subr.mxu0 0.0
        %552 = vmatpush1.msra.mxu0 0.0
        %553 = vmatprep.subr.mxu0 0.0
        %554 = vmatpush1.msra.mxu0 0.0
        %555 = vmatprep.subr.mxu0 0.0
        %556 = vmatpush1.msra.mxu0 0.0
        %557 = vmatprep.subr.mxu0 0.0
        %558 = vmatpush1.msra.mxu0 0.0
        %559 = vmatprep.subr.mxu0 0.0
        %560 = vmatpush1.msra.mxu0 0.0
        %561 = vmatprep.subr.mxu0 0.0
        %562 = vmatpush1.msra.mxu0 0.0
        %563 = vmatprep.subr.mxu0 0.0
        %564 = vmatpush1.msra.mxu0 0.0
        %565 = vmatprep.mubr.f32.mxu0 0.0
        %566 = vmatmul.mubr.f32.gmra.mrb[0].mxu0 %v484
        %v567 = vpop.f32.mrb[0].mxu0
        %v568 = vadd.f32 0.0, %v567
        %v569 = vpop.f32.mrb[0].mxu0
        %570 = vdwg.mxu0
        %571 = vst.msk [vmem:[%s294] sm:$0xff] %vm344, %v568
        %572 = vst [vmem:[%s301] sm:$0xff] %v484
        %s573 = sand.u32 %s153, 1
        %s574 = scalar_lea.sflag [#allocation3], %s573
        %s575 = sand.u32 %s153, 1
        %s576 = smul.addr %s575, 8
        %s577 = scalar_lea.vmem [#allocation2], %s576
        %s578 = sand.u32 %s181, 1
        %s579 = scalar_lea.sflag [#allocation5], %s578
        %s580 = sand.u32 %s181, 1
        %s581 = smul.addr %s580, 8
        %s582 = scalar_lea.vmem [#allocation4], %s581
        // Predicated region
        $region37: #{_attention_call.1} parent=35 // pred_check
          %p583 = pneg %p163
        $region38: #{_attention_call.1} parent=35 // pred_check_branch
          %585 = sbr.rel (%p583) target = $region40
        $region39: #{_attention_call.1} parent=35 // pred_region
          %s587 = ssub.s32 128, 128
          %588 = vsyncadd %s574, %s587
          %s589 = sadd.s32 %s28, %s27
          %s590 = smul.addr %s589, 128
          %s591 = scalar_lea.hbm %s4, %s590
          %s593 = sshll.u32 %s577, 4
          %s594 = int_to_ptr.vmem [resolvable:$true] %s593
          %596 = dma.vmem_to_hbm [thread:$0]  %s594, 128, %s591, %s574
        $region40: #{_attention_call.1} parent=35 // pred_fallthru
          _
        // Predicated region
        $region41: #{_attention_call.1} parent=35 // pred_check
          %p597 = pneg %p191
        $region42: #{_attention_call.1} parent=35 // pred_check_branch
          %599 = sbr.rel (%p597) target = $region44
        $region43: #{_attention_call.1} parent=35 // pred_region
          %s601 = ssub.s32 128, 128
          %602 = vsyncadd %s579, %s601
          %s603 = sadd.s32 %s28, %s27
          %s604 = smul.addr %s603, 128
          %s605 = scalar_lea.hbm %s5, %s604
          %s607 = sshll.u32 %s582, 4
          %s608 = int_to_ptr.vmem [resolvable:$true] %s607
          %610 = dma.vmem_to_hbm [thread:$0]  %s608, 128, %s605, %s579
        $region44: #{_attention_call.1} parent=35 // pred_fallthru
          _
      $region36: #{_attention_call.1} parent=5 // pred_fallthru
        _
      %p611 = scmp.le.s32.totalorder 2, %s18
      // Predicated region
      $region45: #{_attention_call.1} parent=5 // pred_check
        %p612 = pneg %p611
      $region46: #{_attention_call.1} parent=5 // pred_check_branch
        %614 = sbr.rel (%p612) target = $region48
      $region47: #{_attention_call.1} parent=5 // pred_region
        %s615 = ssub.s32 %s18, 2
        // Predicated region
        $region49: #{_attention_call.1} parent=47 // pred_check
          %p616 = pneg %p169
        $region50: #{_attention_call.1} parent=47 // pred_check_branch
          %618 = sbr.rel (%p616) target = $region52
        $region51: #{_attention_call.1} parent=47 // pred_region
          %s619 = sand.u32 %s154, 1
          %s620 = scalar_lea.sflag [#allocation3], %s619
          %s621 = sand.u32 %s154, 1
          %s622 = smul.addr %s621, 8
          %s623 = scalar_lea.vmem [#allocation2], %s622
          %624 = dma.done %s620, 128
        $region52: #{_attention_call.1} parent=47 // pred_fallthru
          _
        // Predicated region
        $region53: #{_attention_call.1} parent=47 // pred_check
          %p625 = pneg %p197
        $region54: #{_attention_call.1} parent=47 // pred_check_branch
          %627 = sbr.rel (%p625) target = $region56
        $region55: #{_attention_call.1} parent=47 // pred_region
          %s628 = sand.u32 %s182, 1
          %s629 = scalar_lea.sflag [#allocation5], %s628
          %s630 = sand.u32 %s182, 1
          %s631 = smul.addr %s630, 8
          %s632 = scalar_lea.vmem [#allocation4], %s631
          %633 = dma.done %s629, 128
        $region56: #{_attention_call.1} parent=47 // pred_fallthru
          _
      $region48: #{_attention_call.1} parent=5 // pred_fallthru
        _
    $region6: #{_attention_call.1} parent=1 // loop_footer
      %s22 = sadd.s32 1, %s18
    $region7: #{_attention_call.1} parent=1 // loop_footer_branch
      %17 = sbr.rel target = $region3
    $region8: #{_attention_call.1} parent=1 // loop_exit
      _
    %634 = vsyncpa [#allocation3], 1
    %s635 = scalar_lea.sflag [#allocation3], 1
    %636 = vsyncpa %s635, 1
    %637 = vsyncpa [#allocation5], 1
    %s638 = scalar_lea.sflag [#allocation5], 1
    %639 = vsyncpa %s638, 1

</llo_original>
